<compile_context>
chip_gen: v5e
topology: v5e:2x2
jax: 0.10.0
libtpu: 0.0.40
codegen_flags: <defaults>
</compile_context>

<pallas_src>
import math

import jax
import jax.numpy as jnp
from jax import lax
from jax.experimental import pallas as pl
from jax.experimental.pallas import tpu as pltpu


# ---------------------------------------------------------------------------
# Mask construction (mirrors create_masks for input_order='sequential').
# ---------------------------------------------------------------------------
def create_masks(input_size, hidden_size, n_hidden, input_degrees=None):
    degrees = []
    degrees.append(jnp.arange(input_size) if input_degrees is None else input_degrees)
    for _ in range(n_hidden + 1):
        degrees.append(jnp.arange(hidden_size) % (input_size - 1))
    if input_degrees is None:
        degrees.append(jnp.arange(input_size) % input_size - 1)
    else:
        degrees.append(input_degrees % input_size - 1)
    masks = [
        (d1[:, None] >= d0[None, :]).astype(jnp.float32)
        for d0, d1 in zip(degrees[:-1], degrees[1:])
    ]
    return masks, degrees[0]


# ---------------------------------------------------------------------------
# Fused kernel: whole flow in one pallas_call.
#
# Packed parameter layout, P = max(hidden_size, 2 * input_size):
#   W_all : (n_blocks, n_layers, P, P)    W_all[b, l, :in_l, :out_l] = (W_l * M_l).T
#   b_all : (n_blocks, n_layers + 2, P)   rows 0..n_layers-1 = biases,
#                                         row n_layers = log_gamma, row n_layers+1 = beta
# Zero padding is self-consistent: padded activation columns stay exactly 0
# through every layer (zero weight rows/cols + zero bias padding + ReLU).
# ---------------------------------------------------------------------------
def make_maf_kernel(n_blocks, n_layers, D, P, B, eps=1e-5):
    def kernel(x_ref, w_ref, b_ref, u_ref, ld_ref):
        x = x_ref[...]                                    # (B, D)
        pad = jnp.zeros((B, P - D), jnp.float32)          # hoisted out of the loop
        ld_made = jnp.zeros((B, D), jnp.float32)          # per-sample MADE terms
        ld_bn = jnp.zeros((1, D), jnp.float32)            # batch-shared BN terms

        for blk in range(n_blocks):
            # ---- MADE: masked MLP (masks pre-folded into weights) ----
            h = jnp.concatenate([x, pad], axis=1)         # (B, P)
            h = jnp.dot(h, w_ref[blk, 0],
                        preferred_element_type=jnp.float32) + b_ref[blk, 0:1, :]
            for l in range(1, n_layers):
                h = jnp.maximum(h, 0.0)
                h = jnp.dot(h, w_ref[blk, l],
                            preferred_element_type=jnp.float32) + b_ref[blk, l:l + 1, :]

            m = h[:, :D]
            loga = h[:, D:2 * D]
            u = (x - m) * jnp.exp(-loga)                  # MADE forward
            ld_made = ld_made - loga                      # log|det| of MADE

            # ---- BatchNorm (training-mode batch stats, unbiased variance) ----
            mean = jnp.mean(u, axis=0, keepdims=True)
            var = jnp.sum((u - mean) ** 2, axis=0, keepdims=True) * (1.0 / (B - 1))
            inv_std = lax.rsqrt(var + eps)                # EUP rsqrt, no sqrt+div
            log_gamma = b_ref[blk, n_layers:n_layers + 1, :D]
            beta = b_ref[blk, n_layers + 1:n_layers + 2, :D]
            x = jnp.exp(log_gamma) * ((u - mean) * inv_std) + beta
            ld_bn = ld_bn + (log_gamma - 0.5 * jnp.log(var + eps))

        u_ref[...] = x
        ld_ref[...] = ld_made + ld_bn                     # single broadcast add

    return kernel


def maf_forward(x, W_all, b_all, n_hidden):
    """FlowSequential forward: returns (u, sum_log_abs_det_jacobians)."""
    B, D = x.shape
    n_blocks = W_all.shape[0]
    n_layers = n_hidden + 2
    P = W_all.shape[-1]

    vmem = pl.BlockSpec(memory_space=pltpu.MemorySpace.VMEM)
    return pl.pallas_call(
        make_maf_kernel(n_blocks, n_layers, D, P, B),
        out_shape=(
            jax.ShapeDtypeStruct((B, D), jnp.float32),
            jax.ShapeDtypeStruct((B, D), jnp.float32),
        ),
        in_specs=[vmem, vmem, vmem],
        out_specs=(vmem, vmem),
        compiler_params=pltpu.CompilerParams(vmem_limit_bytes=32 * 1024 * 1024),
    )(x, W_all, b_all)


# ---------------------------------------------------------------------------
# Parameter construction: mirrors MAF.__init__, then folds masks into
# pre-transposed, zero-padded packed weight / bias slabs stacked over blocks.
# ---------------------------------------------------------------------------
def init_maf_packed(key, n_blocks, input_size, hidden_size, n_hidden):
    D, H = input_size, hidden_size
    n_layers = n_hidden + 2
    P = max(H, 2 * D)

    W_blocks, b_blocks = [], []
    input_degrees = None
    for _ in range(n_blocks):
        masks, in_deg = create_masks(D, H, n_hidden, input_degrees)
        input_degrees = jnp.flip(in_deg, 0)  # MAF flips degrees between blocks

        layer_dims = [(H, D)] + [(H, H)] * n_hidden + [(2 * D, H)]
        # final mask repeated along the output dim (masks[-1].repeat(2, 1))
        layer_masks = list(masks[:-1]) + [jnp.concatenate([masks[-1], masks[-1]], axis=0)]

        W_packed = jnp.zeros((n_layers, P, P), jnp.float32)
        b_packed = jnp.zeros((n_layers + 2, P), jnp.float32)
        for l, ((out_f, in_f), M) in enumerate(zip(layer_dims, layer_masks)):
            key, kw, kb = jax.random.split(key, 3)
            bound = 1.0 / math.sqrt(in_f)  # nn.Linear default init bounds
            W = jax.random.uniform(kw, (out_f, in_f), jnp.float32, -bound, bound)
            b = jax.random.uniform(kb, (out_f,), jnp.float32, -bound, bound)
            Wf = (W * M).T                               # fold mask + pre-transpose
            W_packed = W_packed.at[l, :in_f, :out_f].set(Wf)
            b_packed = b_packed.at[l, :out_f].set(b)
        # BatchNorm params log_gamma = 0, beta = 0 (rows n_layers, n_layers+1 already 0)
        W_blocks.append(W_packed)
        b_blocks.append(b_packed)

    W_all = jnp.stack(W_blocks, axis=0)   # (n_blocks, n_layers, P, P)
    b_all = jnp.stack(b_blocks, axis=0)   # (n_blocks, n_layers + 2, P)
    return W_all, b_all


# ---------------------------------------------------------------------------
# Pure-JAX reference (same math, no Pallas) for a correctness check.
# TODO(synk): running_mean / running_var buffer updates of BatchNorm are a
# stateful side effect and are not produced (forward outputs don't use them).
# ---------------------------------------------------------------------------
def maf_forward_ref(x, W_all, b_all, n_hidden, eps=1e-5):
    B, D = x.shape
    n_blocks = W_all.shape[0]
    n_layers = n_hidden + 2
    P = W_all.shape[-1]
    sum_ld = jnp.zeros((B, D), jnp.float32)
    for blk in range(n_blocks):
        Wp, bp = W_all[blk], b_all[blk]
        h = jnp.pad(x, ((0, 0), (0, P - D)))
        h = h @ Wp[0] + bp[0]
        for l in range(1, n_layers):
            h = jnp.maximum(h, 0.0)
            h = h @ Wp[l] + bp[l]
        m, loga = h[:, :D], h[:, D:2 * D]
        u = (x - m) * jnp.exp(-loga)
        sum_ld = sum_ld - loga
        mean = jnp.mean(u, axis=0, keepdims=True)
        var = jnp.sum((u - mean) ** 2, axis=0, keepdims=True) / (B - 1)
        x = jnp.exp(bp[n_layers, :D]) * (u - mean) / jnp.sqrt(var + eps) + bp[n_layers + 1, :D]
        sum_ld = sum_ld + (bp[n_layers, :D] - 0.5 * jnp.log(var + eps))
    return x, sum_ld


# ---------------------------------------------------------------------------
if __name__ == "__main__":
    # Small, module-consistent config: MAF(n_blocks=2, input_size=4,
    # hidden_size=32, n_hidden=1), batch = 8.
    n_blocks, input_size, hidden_size, n_hidden = 2, 4, 32, 1
    batch = 8

    key = jax.random.PRNGKey(0)
    key_params, key_x = jax.random.split(key)

    W_all, b_all = init_maf_packed(key_params, n_blocks, input_size, hidden_size, n_hidden)
    x = jax.random.normal(key_x, (batch, input_size), dtype=jnp.float32)

    u, sum_log_abs_det = maf_forward(x, W_all, b_all, n_hidden)
    jax.block_until_ready((u, sum_log_abs_det))

    u_ref, ld_ref = maf_forward_ref(x, W_all, b_all, n_hidden)

    assert u.shape == (batch, input_size)
    assert sum_log_abs_det.shape == (batch, input_size)
    assert bool(jnp.all(jnp.isfinite(u))) and bool(jnp.all(jnp.isfinite(sum_log_abs_det)))
    assert bool(jnp.allclose(u, u_ref, atol=1e-5, rtol=1e-5))
    assert bool(jnp.allclose(sum_log_abs_det, ld_ref, atol=1e-5, rtol=1e-5))

    print("KERNEL_OK")
</pallas_src>

<mosaic_0001>
module attributes {stable_mosaic.version = 11 : i64} {
  func.func @kernel(%arg0: memref<8x4xf32, #tpu.memory_space<vmem>>, %arg1: memref<2x3x32x32xf32, #tpu.memory_space<vmem>>, %arg2: memref<2x5x32xf32, #tpu.memory_space<vmem>>, %arg3: memref<8x4xf32, #tpu.memory_space<vmem>>, %arg4: memref<8x4xf32, #tpu.memory_space<vmem>>) attributes {dimension_semantics = [], scalar_prefetch = 0 : i64, scratch_operands = 0 : i64, tpu.core_type = #tpu.core_type<tc>} {
    %c0 = arith.constant 0 : index
    %c0_0 = arith.constant 0 : index
    %0 = vector.load %arg0[%c0, %c0_0] : memref<8x4xf32, #tpu.memory_space<vmem>>, vector<8x4xf32>
    %cst = arith.constant 0.000000e+00 : f32
    %1 = vector.broadcast %cst : f32 to vector<8x28xf32>
    %cst_1 = arith.constant 0.000000e+00 : f32
    %2 = vector.broadcast %cst_1 : f32 to vector<8x4xf32>
    %cst_2 = arith.constant 0.000000e+00 : f32
    %3 = vector.broadcast %cst_2 : f32 to vector<1x4xf32>
    %4 = tpu.concatenate %0, %1 in 1 : vector<8x4xf32>, vector<8x28xf32> -> vector<8x32xf32>
    %c0_3 = arith.constant 0 : index
    %c0_4 = arith.constant 0 : index
    %c0_5 = arith.constant 0 : index
    %c0_6 = arith.constant 0 : index
    %5 = vector.load %arg1[%c0_3, %c0_4, %c0_5, %c0_6] : memref<2x3x32x32xf32, #tpu.memory_space<vmem>>, vector<1x1x32x32xf32>
    %6 = vector.shape_cast %5 : vector<1x1x32x32xf32> to vector<32x32xf32>
    %cst_7 = arith.constant dense<0.000000e+00> : vector<8x32xf32>
    %7 = tpu.matmul %4, %6, %cst_7 {dimension_numbers = #tpu.dot_dimension_numbers<[1], [0], [0], [1], [0, 0, 1, 1], [], []>} : vector<8x32xf32>, vector<32x32xf32>, vector<8x32xf32> -> vector<8x32xf32>
    %c0_8 = arith.constant 0 : index
    %c0_9 = arith.constant 0 : index
    %c0_10 = arith.constant 0 : index
    %8 = vector.load %arg2[%c0_8, %c0_9, %c0_10] : memref<2x5x32xf32, #tpu.memory_space<vmem>>, vector<1x1x32xf32>
    %9 = vector.shape_cast %8 : vector<1x1x32xf32> to vector<1x32xf32>
    %10 = vector.broadcast %9 : vector<1x32xf32> to vector<8x32xf32>
    %11 = arith.addf %7, %10 : vector<8x32xf32>
    %cst_11 = arith.constant 0.000000e+00 : f32
    %12 = vector.broadcast %cst_11 : f32 to vector<8x32xf32>
    %13 = arith.maximumf %11, %12 : vector<8x32xf32>
    %c0_12 = arith.constant 0 : index
    %c1 = arith.constant 1 : index
    %c0_13 = arith.constant 0 : index
    %c0_14 = arith.constant 0 : index
    %14 = vector.load %arg1[%c0_12, %c1, %c0_13, %c0_14] : memref<2x3x32x32xf32, #tpu.memory_space<vmem>>, vector<1x1x32x32xf32>
    %15 = vector.shape_cast %14 : vector<1x1x32x32xf32> to vector<32x32xf32>
    %cst_15 = arith.constant dense<0.000000e+00> : vector<8x32xf32>
    %16 = tpu.matmul %13, %15, %cst_15 {dimension_numbers = #tpu.dot_dimension_numbers<[1], [0], [0], [1], [0, 0, 1, 1], [], []>} : vector<8x32xf32>, vector<32x32xf32>, vector<8x32xf32> -> vector<8x32xf32>
    %c0_16 = arith.constant 0 : index
    %c1_17 = arith.constant 1 : index
    %c0_18 = arith.constant 0 : index
    %17 = vector.load %arg2[%c0_16, %c1_17, %c0_18] : memref<2x5x32xf32, #tpu.memory_space<vmem>>, vector<1x1x32xf32>
    %18 = vector.shape_cast %17 : vector<1x1x32xf32> to vector<1x32xf32>
    %19 = vector.broadcast %18 : vector<1x32xf32> to vector<8x32xf32>
    %20 = arith.addf %16, %19 : vector<8x32xf32>
    %cst_19 = arith.constant 0.000000e+00 : f32
    %21 = vector.broadcast %cst_19 : f32 to vector<8x32xf32>
    %22 = arith.maximumf %20, %21 : vector<8x32xf32>
    %c0_20 = arith.constant 0 : index
    %c2 = arith.constant 2 : index
    %c0_21 = arith.constant 0 : index
    %c0_22 = arith.constant 0 : index
    %23 = vector.load %arg1[%c0_20, %c2, %c0_21, %c0_22] : memref<2x3x32x32xf32, #tpu.memory_space<vmem>>, vector<1x1x32x32xf32>
    %24 = vector.shape_cast %23 : vector<1x1x32x32xf32> to vector<32x32xf32>
    %cst_23 = arith.constant dense<0.000000e+00> : vector<8x32xf32>
    %25 = tpu.matmul %22, %24, %cst_23 {dimension_numbers = #tpu.dot_dimension_numbers<[1], [0], [0], [1], [0, 0, 1, 1], [], []>} : vector<8x32xf32>, vector<32x32xf32>, vector<8x32xf32> -> vector<8x32xf32>
    %c0_24 = arith.constant 0 : index
    %c2_25 = arith.constant 2 : index
    %c0_26 = arith.constant 0 : index
    %26 = vector.load %arg2[%c0_24, %c2_25, %c0_26] : memref<2x5x32xf32, #tpu.memory_space<vmem>>, vector<1x1x32xf32>
    %27 = vector.shape_cast %26 : vector<1x1x32xf32> to vector<1x32xf32>
    %28 = vector.broadcast %27 : vector<1x32xf32> to vector<8x32xf32>
    %29 = arith.addf %25, %28 : vector<8x32xf32>
    %30 = vector.extract_strided_slice %29 {offsets = [0, 0], sizes = [8, 4], strides = [1, 1]} : vector<8x32xf32> to vector<8x4xf32>
    %31 = vector.extract_strided_slice %29 {offsets = [0, 4], sizes = [8, 4], strides = [1, 1]} : vector<8x32xf32> to vector<8x4xf32>
    %32 = arith.subf %0, %30 : vector<8x4xf32>
    %cst_27 = arith.constant 0.000000e+00 : f32
    %33 = vector.broadcast %cst_27 : f32 to vector<8x4xf32>
    %34 = arith.subf %33, %31 : vector<8x4xf32>
    %35 = math.exp %34 : vector<8x4xf32>
    %36 = arith.mulf %32, %35 : vector<8x4xf32>
    %37 = arith.subf %2, %31 : vector<8x4xf32>
    %cst_28 = arith.constant dense<0.000000e+00> : vector<4xf32>
    %38 = vector.multi_reduction <add>, %36, %cst_28 [0] : vector<8x4xf32> to vector<4xf32>
    %39 = vector.shape_cast %38 : vector<4xf32> to vector<1x4xf32>
    %cst_29 = arith.constant 8.000000e+00 : f32
    %40 = vector.broadcast %cst_29 : f32 to vector<1x4xf32>
    %41 = arith.divf %39, %40 : vector<1x4xf32>
    %42 = vector.broadcast %41 : vector<1x4xf32> to vector<8x4xf32>
    %43 = arith.subf %36, %42 : vector<8x4xf32>
    %44 = arith.mulf %43, %43 : vector<8x4xf32>
    %cst_30 = arith.constant dense<0.000000e+00> : vector<4xf32>
    %45 = vector.multi_reduction <add>, %44, %cst_30 [0] : vector<8x4xf32> to vector<4xf32>
    %46 = vector.shape_cast %45 : vector<4xf32> to vector<1x4xf32>
    %cst_31 = arith.constant 0.142857149 : f32
    %47 = vector.broadcast %cst_31 : f32 to vector<1x4xf32>
    %48 = arith.mulf %46, %47 : vector<1x4xf32>
    %cst_32 = arith.constant 9.99999974E-6 : f32
    %49 = vector.broadcast %cst_32 : f32 to vector<1x4xf32>
    %50 = arith.addf %48, %49 : vector<1x4xf32>
    %51 = math.rsqrt %50 : vector<1x4xf32>
    %c0_33 = arith.constant 0 : index
    %c3 = arith.constant 3 : index
    %c0_34 = arith.constant 0 : index
    %52 = vector.load %arg2[%c0_33, %c3, %c0_34] : memref<2x5x32xf32, #tpu.memory_space<vmem>>, vector<1x1x4xf32>
    %53 = vector.shape_cast %52 : vector<1x1x4xf32> to vector<1x4xf32>
    %c0_35 = arith.constant 0 : index
    %c4 = arith.constant 4 : index
    %c0_36 = arith.constant 0 : index
    %54 = vector.load %arg2[%c0_35, %c4, %c0_36] : memref<2x5x32xf32, #tpu.memory_space<vmem>>, vector<1x1x4xf32>
    %55 = vector.shape_cast %54 : vector<1x1x4xf32> to vector<1x4xf32>
    %56 = math.exp %53 : vector<1x4xf32>
    %57 = vector.broadcast %41 : vector<1x4xf32> to vector<8x4xf32>
    %58 = arith.subf %36, %57 : vector<8x4xf32>
    %59 = vector.broadcast %51 : vector<1x4xf32> to vector<8x4xf32>
    %60 = arith.mulf %58, %59 : vector<8x4xf32>
    %61 = vector.broadcast %56 : vector<1x4xf32> to vector<8x4xf32>
    %62 = arith.mulf %61, %60 : vector<8x4xf32>
    %63 = vector.broadcast %55 : vector<1x4xf32> to vector<8x4xf32>
    %64 = arith.addf %62, %63 : vector<8x4xf32>
    %cst_37 = arith.constant 9.99999974E-6 : f32
    %65 = vector.broadcast %cst_37 : f32 to vector<1x4xf32>
    %66 = arith.addf %48, %65 : vector<1x4xf32>
    %67 = math.log %66 : vector<1x4xf32>
    %cst_38 = arith.constant 5.000000e-01 : f32
    %68 = vector.broadcast %cst_38 : f32 to vector<1x4xf32>
    %69 = arith.mulf %68, %67 : vector<1x4xf32>
    %70 = arith.subf %53, %69 : vector<1x4xf32>
    %71 = arith.addf %3, %70 : vector<1x4xf32>
    %72 = tpu.concatenate %64, %1 in 1 : vector<8x4xf32>, vector<8x28xf32> -> vector<8x32xf32>
    %c1_39 = arith.constant 1 : index
    %c0_40 = arith.constant 0 : index
    %c0_41 = arith.constant 0 : index
    %c0_42 = arith.constant 0 : index
    %73 = vector.load %arg1[%c1_39, %c0_40, %c0_41, %c0_42] : memref<2x3x32x32xf32, #tpu.memory_space<vmem>>, vector<1x1x32x32xf32>
    %74 = vector.shape_cast %73 : vector<1x1x32x32xf32> to vector<32x32xf32>
    %cst_43 = arith.constant dense<0.000000e+00> : vector<8x32xf32>
    %75 = tpu.matmul %72, %74, %cst_43 {dimension_numbers = #tpu.dot_dimension_numbers<[1], [0], [0], [1], [0, 0, 1, 1], [], []>} : vector<8x32xf32>, vector<32x32xf32>, vector<8x32xf32> -> vector<8x32xf32>
    %c1_44 = arith.constant 1 : index
    %c0_45 = arith.constant 0 : index
    %c0_46 = arith.constant 0 : index
    %76 = vector.load %arg2[%c1_44, %c0_45, %c0_46] : memref<2x5x32xf32, #tpu.memory_space<vmem>>, vector<1x1x32xf32>
    %77 = vector.shape_cast %76 : vector<1x1x32xf32> to vector<1x32xf32>
    %78 = vector.broadcast %77 : vector<1x32xf32> to vector<8x32xf32>
    %79 = arith.addf %75, %78 : vector<8x32xf32>
    %cst_47 = arith.constant 0.000000e+00 : f32
    %80 = vector.broadcast %cst_47 : f32 to vector<8x32xf32>
    %81 = arith.maximumf %79, %80 : vector<8x32xf32>
    %c1_48 = arith.constant 1 : index
    %c1_49 = arith.constant 1 : index
    %c0_50 = arith.constant 0 : index
    %c0_51 = arith.constant 0 : index
    %82 = vector.load %arg1[%c1_48, %c1_49, %c0_50, %c0_51] : memref<2x3x32x32xf32, #tpu.memory_space<vmem>>, vector<1x1x32x32xf32>
    %83 = vector.shape_cast %82 : vector<1x1x32x32xf32> to vector<32x32xf32>
    %cst_52 = arith.constant dense<0.000000e+00> : vector<8x32xf32>
    %84 = tpu.matmul %81, %83, %cst_52 {dimension_numbers = #tpu.dot_dimension_numbers<[1], [0], [0], [1], [0, 0, 1, 1], [], []>} : vector<8x32xf32>, vector<32x32xf32>, vector<8x32xf32> -> vector<8x32xf32>
    %c1_53 = arith.constant 1 : index
    %c1_54 = arith.constant 1 : index
    %c0_55 = arith.constant 0 : index
    %85 = vector.load %arg2[%c1_53, %c1_54, %c0_55] : memref<2x5x32xf32, #tpu.memory_space<vmem>>, vector<1x1x32xf32>
    %86 = vector.shape_cast %85 : vector<1x1x32xf32> to vector<1x32xf32>
    %87 = vector.broadcast %86 : vector<1x32xf32> to vector<8x32xf32>
    %88 = arith.addf %84, %87 : vector<8x32xf32>
    %cst_56 = arith.constant 0.000000e+00 : f32
    %89 = vector.broadcast %cst_56 : f32 to vector<8x32xf32>
    %90 = arith.maximumf %88, %89 : vector<8x32xf32>
    %c1_57 = arith.constant 1 : index
    %c2_58 = arith.constant 2 : index
    %c0_59 = arith.constant 0 : index
    %c0_60 = arith.constant 0 : index
    %91 = vector.load %arg1[%c1_57, %c2_58, %c0_59, %c0_60] : memref<2x3x32x32xf32, #tpu.memory_space<vmem>>, vector<1x1x32x32xf32>
    %92 = vector.shape_cast %91 : vector<1x1x32x32xf32> to vector<32x32xf32>
    %cst_61 = arith.constant dense<0.000000e+00> : vector<8x32xf32>
    %93 = tpu.matmul %90, %92, %cst_61 {dimension_numbers = #tpu.dot_dimension_numbers<[1], [0], [0], [1], [0, 0, 1, 1], [], []>} : vector<8x32xf32>, vector<32x32xf32>, vector<8x32xf32> -> vector<8x32xf32>
    %c1_62 = arith.constant 1 : index
    %c2_63 = arith.constant 2 : index
    %c0_64 = arith.constant 0 : index
    %94 = vector.load %arg2[%c1_62, %c2_63, %c0_64] : memref<2x5x32xf32, #tpu.memory_space<vmem>>, vector<1x1x32xf32>
    %95 = vector.shape_cast %94 : vector<1x1x32xf32> to vector<1x32xf32>
    %96 = vector.broadcast %95 : vector<1x32xf32> to vector<8x32xf32>
    %97 = arith.addf %93, %96 : vector<8x32xf32>
    %98 = vector.extract_strided_slice %97 {offsets = [0, 0], sizes = [8, 4], strides = [1, 1]} : vector<8x32xf32> to vector<8x4xf32>
    %99 = vector.extract_strided_slice %97 {offsets = [0, 4], sizes = [8, 4], strides = [1, 1]} : vector<8x32xf32> to vector<8x4xf32>
    %100 = arith.subf %64, %98 : vector<8x4xf32>
    %cst_65 = arith.constant 0.000000e+00 : f32
    %101 = vector.broadcast %cst_65 : f32 to vector<8x4xf32>
    %102 = arith.subf %101, %99 : vector<8x4xf32>
    %103 = math.exp %102 : vector<8x4xf32>
    %104 = arith.mulf %100, %103 : vector<8x4xf32>
    %105 = arith.subf %37, %99 : vector<8x4xf32>
    %cst_66 = arith.constant dense<0.000000e+00> : vector<4xf32>
    %106 = vector.multi_reduction <add>, %104, %cst_66 [0] : vector<8x4xf32> to vector<4xf32>
    %107 = vector.shape_cast %106 : vector<4xf32> to vector<1x4xf32>
    %cst_67 = arith.constant 8.000000e+00 : f32
    %108 = vector.broadcast %cst_67 : f32 to vector<1x4xf32>
    %109 = arith.divf %107, %108 : vector<1x4xf32>
    %110 = vector.broadcast %109 : vector<1x4xf32> to vector<8x4xf32>
    %111 = arith.subf %104, %110 : vector<8x4xf32>
    %112 = arith.mulf %111, %111 : vector<8x4xf32>
    %cst_68 = arith.constant dense<0.000000e+00> : vector<4xf32>
    %113 = vector.multi_reduction <add>, %112, %cst_68 [0] : vector<8x4xf32> to vector<4xf32>
    %114 = vector.shape_cast %113 : vector<4xf32> to vector<1x4xf32>
    %cst_69 = arith.constant 0.142857149 : f32
    %115 = vector.broadcast %cst_69 : f32 to vector<1x4xf32>
    %116 = arith.mulf %114, %115 : vector<1x4xf32>
    %cst_70 = arith.constant 9.99999974E-6 : f32
    %117 = vector.broadcast %cst_70 : f32 to vector<1x4xf32>
    %118 = arith.addf %116, %117 : vector<1x4xf32>
    %119 = math.rsqrt %118 : vector<1x4xf32>
    %c1_71 = arith.constant 1 : index
    %c3_72 = arith.constant 3 : index
    %c0_73 = arith.constant 0 : index
    %120 = vector.load %arg2[%c1_71, %c3_72, %c0_73] : memref<2x5x32xf32, #tpu.memory_space<vmem>>, vector<1x1x4xf32>
    %121 = vector.shape_cast %120 : vector<1x1x4xf32> to vector<1x4xf32>
    %c1_74 = arith.constant 1 : index
    %c4_75 = arith.constant 4 : index
    %c0_76 = arith.constant 0 : index
    %122 = vector.load %arg2[%c1_74, %c4_75, %c0_76] : memref<2x5x32xf32, #tpu.memory_space<vmem>>, vector<1x1x4xf32>
    %123 = vector.shape_cast %122 : vector<1x1x4xf32> to vector<1x4xf32>
    %124 = math.exp %121 : vector<1x4xf32>
    %125 = vector.broadcast %109 : vector<1x4xf32> to vector<8x4xf32>
    %126 = arith.subf %104, %125 : vector<8x4xf32>
    %127 = vector.broadcast %119 : vector<1x4xf32> to vector<8x4xf32>
    %128 = arith.mulf %126, %127 : vector<8x4xf32>
    %129 = vector.broadcast %124 : vector<1x4xf32> to vector<8x4xf32>
    %130 = arith.mulf %129, %128 : vector<8x4xf32>
    %131 = vector.broadcast %123 : vector<1x4xf32> to vector<8x4xf32>
    %132 = arith.addf %130, %131 : vector<8x4xf32>
    %cst_77 = arith.constant 9.99999974E-6 : f32
    %133 = vector.broadcast %cst_77 : f32 to vector<1x4xf32>
    %134 = arith.addf %116, %133 : vector<1x4xf32>
    %135 = math.log %134 : vector<1x4xf32>
    %cst_78 = arith.constant 5.000000e-01 : f32
    %136 = vector.broadcast %cst_78 : f32 to vector<1x4xf32>
    %137 = arith.mulf %136, %135 : vector<1x4xf32>
    %138 = arith.subf %121, %137 : vector<1x4xf32>
    %139 = arith.addf %71, %138 : vector<1x4xf32>
    %c0_79 = arith.constant 0 : index
    %c0_80 = arith.constant 0 : index
    %140 = vector.load %arg3[%c0_79, %c0_80] : memref<8x4xf32, #tpu.memory_space<vmem>>, vector<8x4xf32>
    tpu.vector_store %arg3[%c0_79, %c0_80], %132 {strides = array<i32>} : memref<8x4xf32, #tpu.memory_space<vmem>>, vector<8x4xf32>,
    %141 = vector.broadcast %139 : vector<1x4xf32> to vector<8x4xf32>
    %142 = arith.addf %105, %141 : vector<8x4xf32>
    %c0_81 = arith.constant 0 : index
    %c0_82 = arith.constant 0 : index
    %143 = vector.load %arg4[%c0_81, %c0_82] : memref<8x4xf32, #tpu.memory_space<vmem>>, vector<8x4xf32>
    tpu.vector_store %arg4[%c0_81, %c0_82], %142 {strides = array<i32>} : memref<8x4xf32, #tpu.memory_space<vmem>>, vector<8x4xf32>,
    return
  }
}

</mosaic_0001>

<llo_original>
// kernel: tpu_custom_call.1
$region0: #{tpu_custom_call.1}
  #allocation0 [shape = 'u32[]', space=smem, size = 0x4, offset = 0x4, fixed_abs, tag = 'smem constant byte address 0x4 - core index']
  #allocation1 [shape = 'u32[72,128]{1,0:T(1,128)}', space=vmem, size = 0x9000, scoped, tag = 'internal scratch']
  %s0 = inlined_call_operand.vmem [shape: f32[8,4], index: 0, kind: input, shape index: {}]
  %s1 = inlined_call_operand.hbm [shape: f32[2,3,32,32], index: 1, kind: input, shape index: {}]
  %s2 = inlined_call_operand.vmem [shape: f32[2,5,32], index: 2, kind: input, shape index: {}]
  %s3 = inlined_call_operand.vmem [shape: f32[8,4], index: 3, kind: output, shape index: {0}]
  %s4 = inlined_call_operand.vmem [shape: f32[8,4], index: 4, kind: output, shape index: {1}]
  %5 = xla_tuple %s3, %s4
  %s6 = sld [smem:[#allocation0]]
  $region34: #{tpu_custom_call.1} parent=0
    _
  %s8 = ssub.s32 1, %s6
  %s9 = scalar_select 0, %s8, %s6
  $region1: #{tpu_custom_call.1} parent=0
    #allocation2 [shape = 'u8[98304]{0}', space=vmem, size = 0x18000, scoped, tag = 'input window, operand 1, single buffered']
    #allocation3 [shape = 's32[1]{0}', space=sflag, size = 0x4, scoped, tag = 'scoped memory for tpu_custom_call.1']
    %10 = vsyncpa [#allocation3], 0
    // Predicated region
    $region2: #{tpu_custom_call.1} parent=1 // pred_check
      _
    $region3: #{tpu_custom_call.1} parent=1 // pred_check_branch
      %12 = sbr.rel (0) target = $region5
    $region4: #{tpu_custom_call.1} parent=1 // pred_region
      _
    $region5: #{tpu_custom_call.1} parent=1 // pred_fallthru
      _
    // Predicated region
    $region6: #{tpu_custom_call.1} parent=1 // pred_check
      _
    $region7: #{tpu_custom_call.1} parent=1 // pred_check_branch
      %14 = sbr.rel (0) target = $region9
    $region8: #{tpu_custom_call.1} parent=1 // pred_region
      %16 = vsyncadd [#allocation3], 0
      %s17 = sshll.u32 %s1, 4
      %s18 = int_to_ptr.hbm [resolvable:$true] %s17
      %s19 = sshll.u32 [#allocation2], 4
      %s20 = int_to_ptr.vmem [resolvable:$true] %s19
      %25 = dma.hbm_to_vmem [thread:$0]  %s18, 3072, %s20, [#allocation3], 128, 128, 8
    $region9: #{tpu_custom_call.1} parent=1 // pred_fallthru
      _
    // Predicated region
    $region10: #{tpu_custom_call.1} parent=1 // pred_check
      _
    $region11: #{tpu_custom_call.1} parent=1 // pred_check_branch
      %27 = sbr.rel (0) target = $region13
    $region12: #{tpu_custom_call.1} parent=1 // pred_region
      _
    $region13: #{tpu_custom_call.1} parent=1 // pred_fallthru
      _
    // Predicated region
    $region14: #{tpu_custom_call.1} parent=1 // pred_check
      _
    $region15: #{tpu_custom_call.1} parent=1 // pred_check_branch
      %29 = sbr.rel (0) target = $region17
    $region16: #{tpu_custom_call.1} parent=1 // pred_region
      %31 = dma.done [#allocation3], 3072
    $region17: #{tpu_custom_call.1} parent=1 // pred_fallthru
      _
    %v32 = vld [vmem:[%s0] sm:$0xff]
    %vm33 = vcmask 31744
    %v34 = vsel %vm33, %v32, 0.0
    %v35 = vld [vmem:[#allocation2] sm:$0xff]
    %v36 = vld [vmem:[#allocation2 + $0x8] sm:$0xff]
    %v37 = vld [vmem:[#allocation2 + $0x10] sm:$0xff]
    %v38 = vld [vmem:[#allocation2 + $0x18] sm:$0xff]
    %v39 = vld [vmem:[%s2] sm:$0x1]
    %v40 = vperm.slane %v39, 0
    %vm41 = vcmask 261120
    %v43 = vsel %vm41, %v34, 0
    %45 = vmatpush.msra.mxu0 0.0
    %46 = vmatpush.msra.mxu0 0.0
    %47 = vmatpush.msra.mxu0 0.0
    %48 = vmatpush.msra.mxu0 0.0
    %49 = vmatpush.msra.mxu0 0.0
    %50 = vmatpush.msra.mxu0 0.0
    %51 = vmatpush.msra.mxu0 0.0
    %52 = vmatpush.msra.mxu0 0.0
    %53 = vmatpush.msra.mxu0 0.0
    %54 = vmatpush.msra.mxu0 0.0
    %55 = vmatpush.msra.mxu0 0.0
    %56 = vmatpush.msra.mxu0 0.0
    %57 = vmatpush.msra.mxu0 %v38
    %58 = vmatpush.msra.mxu0 %v37
    %59 = vmatpush.msra.mxu0 %v36
    %60 = vmatpush.msra.mxu0 %v35
    %61 = vmatmul.f32.gmra.mxu0 %v43
    %v62 = vpop.f32.mrf.mxu0
    %v63 = vadd.f32 %v40, %v62
    %64 = vdwg.mxu0
    %v65 = vmax.f32 %v63, 0.0
    %s66 = scalar_lea.vmem [#allocation2], 32
    %v67 = vld [vmem:[%s66] sm:$0xff]
    %v68 = vld [vmem:[%s66 + $0x8] sm:$0xff]
    %v69 = vld [vmem:[%s66 + $0x10] sm:$0xff]
    %v70 = vld [vmem:[%s66 + $0x18] sm:$0xff]
    %v71 = vld [vmem:[%s2 + $0x1] sm:$0x1]
    %v72 = vperm.slane %v71, 0
    %v74 = vsel %vm41, %v65, 0
    %76 = vmatpush.msra.mxu0 0.0
    %77 = vmatpush.msra.mxu0 0.0
    %78 = vmatpush.msra.mxu0 0.0
    %79 = vmatpush.msra.mxu0 0.0
    %80 = vmatpush.msra.mxu0 0.0
    %81 = vmatpush.msra.mxu0 0.0
    %82 = vmatpush.msra.mxu0 0.0
    %83 = vmatpush.msra.mxu0 0.0
    %84 = vmatpush.msra.mxu0 0.0
    %85 = vmatpush.msra.mxu0 0.0
    %86 = vmatpush.msra.mxu0 0.0
    %87 = vmatpush.msra.mxu0 0.0
    %88 = vmatpush.msra.mxu0 %v70
    %89 = vmatpush.msra.mxu0 %v69
    %90 = vmatpush.msra.mxu0 %v68
    %91 = vmatpush.msra.mxu0 %v67
    %92 = vmatmul.f32.gmra.mxu0 %v74
    %v93 = vpop.f32.mrf.mxu0
    %v94 = vadd.f32 %v72, %v93
    %95 = vdwg.mxu0
    %v96 = vmax.f32 %v94, 0.0
    %s97 = scalar_lea.vmem [#allocation2], 64
    %v98 = vld [vmem:[%s97] sm:$0xff]
    %v99 = vld [vmem:[%s97 + $0x8] sm:$0xff]
    %v100 = vld [vmem:[%s97 + $0x10] sm:$0xff]
    %v101 = vld [vmem:[%s97 + $0x18] sm:$0xff]
    %v102 = vld [vmem:[%s2 + $0x2] sm:$0x1]
    %v103 = vperm.slane %v102, 0
    %v105 = vsel %vm41, %v96, 0
    %107 = vmatpush.msra.mxu0 0.0
    %108 = vmatpush.msra.mxu0 0.0
    %109 = vmatpush.msra.mxu0 0.0
    %110 = vmatpush.msra.mxu0 0.0
    %111 = vmatpush.msra.mxu0 0.0
    %112 = vmatpush.msra.mxu0 0.0
    %113 = vmatpush.msra.mxu0 0.0
    %114 = vmatpush.msra.mxu0 0.0
    %115 = vmatpush.msra.mxu0 0.0
    %116 = vmatpush.msra.mxu0 0.0
    %117 = vmatpush.msra.mxu0 0.0
    %118 = vmatpush.msra.mxu0 0.0
    %119 = vmatpush.msra.mxu0 %v101
    %120 = vmatpush.msra.mxu0 %v100
    %121 = vmatpush.msra.mxu0 %v99
    %122 = vmatpush.msra.mxu0 %v98
    %123 = vmatmul.f32.gmra.mxu0 %v105
    %v124 = vpop.f32.mrf.mxu0
    %v125 = vadd.f32 %v103, %v124
    %126 = vdwg.mxu0
    %v127 = vsub.f32 %v32, %v125
    %v128 = vsub.f32 0.0, %v125
    %v129 = vmul.f32 %v128, 1.442695
    %v130 = vpow.pop %v129
    %132 = vrot.lane.b32.xlu0 %v130, 124
    %v133 = vpop.permute.xlu0 %132
    %v135 = vmul.f32 %v127, %v133
    %v136 = vsel %vm33, %v135, 0.0
    %v137 = vrot.slane %v136, 4
    %v138 = vadd.f32 %v136, %v137
    %v139 = vrot.slane %v138, 2
    %v140 = vadd.f32 %v138, %v139
    %v141 = vrot.slane %v140, 1
    %v142 = vadd.f32 %v140, %v141
    %v143 = vrcp.pop 8.0
    %v144 = vmul.f32 8.0, %v143
    %v145 = vsub.f32 1.0, %v144
    %v146 = vmul.f32 %v143, %v145
    %v147 = vadd.f32 %v143, %v146
    %vm148 = vweird.f32 %v143
    %v149 = vsel %vm148, %v143, %v147
    %v150 = vmul.f32 %v142, %v149
    %v151 = vsub.f32 %v135, %v150
    %v152 = vmul.f32 %v151, %v151
    %v153 = vsel %vm33, %v152, 0.0
    %v154 = vrot.slane %v153, 4
    %v155 = vadd.f32 %v153, %v154
    %v156 = vrot.slane %v155, 2
    %v157 = vadd.f32 %v155, %v156
    %v158 = vrot.slane %v157, 1
    %v159 = vadd.f32 %v157, %v158
    %v160 = vmul.f32 %v159, 0.14285715
    %v161 = vadd.f32 %v160, 1e-05
    %v162 = vrsqrt.pop %v161
    %v163 = vmul.f32 %v162, %v161
    %v164 = vmul.f32 %v163, %v162
    %v165 = vmul.f32 0.5, %v164
    %v166 = vsub.f32 1.5, %v165
    %v167 = vmul.f32 %v162, %v166
    %vm168 = vweird.f32 %v161
    %vm169 = vweird.f32 %v162
    %vm170 = vmor %vm168, %vm169
    %v171 = vsel %vm170, %v162, %v167
    %v172 = vld [vmem:[%s2 + $0x3] sm:$0x1]
    %v173 = vld [vmem:[%s2 + $0x4] sm:$0x1]
    %v174 = vmul.f32 %v172, 1.442695
    %v175 = vpow.pop %v174
    %v176 = vmul.f32 %v151, %v171
    %v177 = vperm.slane %v175, 0
    %v178 = vmul.f32 %v177, %v176
    %v179 = vperm.slane %v173, 0
    %v180 = vadd.f32 %v178, %v179
    %v181 = vlog2.pop %v161
    %v182 = vmul.f32 %v181, 0.6931472
    %v183 = vmul.f32 %v182, 0.5
    %v184 = vsub.f32 %v172, %v183
    %v185 = vadd.f32 %v184, 0.0
    %v186 = vsel %vm33, %v180, 0.0
    %s187 = scalar_lea.vmem [#allocation2], 96
    %v188 = vld [vmem:[%s187] sm:$0xff]
    %v189 = vld [vmem:[%s187 + $0x8] sm:$0xff]
    %v190 = vld [vmem:[%s187 + $0x10] sm:$0xff]
    %v191 = vld [vmem:[%s187 + $0x18] sm:$0xff]
    %s192 = scalar_lea.vmem %s2, 8
    %v193 = vld [vmem:[%s192] sm:$0x1]
    %v194 = vperm.slane %v193, 0
    %v196 = vsel %vm41, %v186, 0
    %198 = vmatpush.msra.mxu0 0.0
    %199 = vmatpush.msra.mxu0 0.0
    %200 = vmatpush.msra.mxu0 0.0
    %201 = vmatpush.msra.mxu0 0.0
    %202 = vmatpush.msra.mxu0 0.0
    %203 = vmatpush.msra.mxu0 0.0
    %204 = vmatpush.msra.mxu0 0.0
    %205 = vmatpush.msra.mxu0 0.0
    %206 = vmatpush.msra.mxu0 0.0
    %207 = vmatpush.msra.mxu0 0.0
    %208 = vmatpush.msra.mxu0 0.0
    %209 = vmatpush.msra.mxu0 0.0
    %210 = vmatpush.msra.mxu0 %v191
    %211 = vmatpush.msra.mxu0 %v190
    %212 = vmatpush.msra.mxu0 %v189
    %213 = vmatpush.msra.mxu0 %v188
    %214 = vmatmul.f32.gmra.mxu0 %v196
    %v215 = vpop.f32.mrf.mxu0
    %v216 = vadd.f32 %v194, %v215
    %217 = vdwg.mxu0
    %v218 = vmax.f32 %v216, 0.0
    %s219 = scalar_lea.vmem [#allocation2], 128
    %v220 = vld [vmem:[%s219] sm:$0xff]
    %v221 = vld [vmem:[%s219 + $0x8] sm:$0xff]
    %v222 = vld [vmem:[%s219 + $0x10] sm:$0xff]
    %v223 = vld [vmem:[%s219 + $0x18] sm:$0xff]
    %v224 = vld [vmem:[%s192 + $0x1] sm:$0x1]
    %v225 = vperm.slane %v224, 0
    %v227 = vsel %vm41, %v218, 0
    %229 = vmatpush.msra.mxu0 0.0
    %230 = vmatpush.msra.mxu0 0.0
    %231 = vmatpush.msra.mxu0 0.0
    %232 = vmatpush.msra.mxu0 0.0
    %233 = vmatpush.msra.mxu0 0.0
    %234 = vmatpush.msra.mxu0 0.0
    %235 = vmatpush.msra.mxu0 0.0
    %236 = vmatpush.msra.mxu0 0.0
    %237 = vmatpush.msra.mxu0 0.0
    %238 = vmatpush.msra.mxu0 0.0
    %239 = vmatpush.msra.mxu0 0.0
    %240 = vmatpush.msra.mxu0 0.0
    %241 = vmatpush.msra.mxu0 %v223
    %242 = vmatpush.msra.mxu0 %v222
    %243 = vmatpush.msra.mxu0 %v221
    %244 = vmatpush.msra.mxu0 %v220
    %245 = vmatmul.f32.gmra.mxu0 %v227
    %v246 = vpop.f32.mrf.mxu0
    %v247 = vadd.f32 %v225, %v246
    %248 = vdwg.mxu0
    %v249 = vmax.f32 %v247, 0.0
    %s250 = scalar_lea.vmem [#allocation2], 160
    %v251 = vld [vmem:[%s250] sm:$0xff]
    %v252 = vld [vmem:[%s250 + $0x8] sm:$0xff]
    %v253 = vld [vmem:[%s250 + $0x10] sm:$0xff]
    %v254 = vld [vmem:[%s250 + $0x18] sm:$0xff]
    %v255 = vld [vmem:[%s192 + $0x2] sm:$0x1]
    %v256 = vperm.slane %v255, 0
    %v258 = vsel %vm41, %v249, 0
    %260 = vmatpush.msra.mxu0 0.0
    %261 = vmatpush.msra.mxu0 0.0
    %262 = vmatpush.msra.mxu0 0.0
    %263 = vmatpush.msra.mxu0 0.0
    %264 = vmatpush.msra.mxu0 0.0
    %265 = vmatpush.msra.mxu0 0.0
    %266 = vmatpush.msra.mxu0 0.0
    %267 = vmatpush.msra.mxu0 0.0
    %268 = vmatpush.msra.mxu0 0.0
    %269 = vmatpush.msra.mxu0 0.0
    %270 = vmatpush.msra.mxu0 0.0
    %271 = vmatpush.msra.mxu0 0.0
    %272 = vmatpush.msra.mxu0 %v254
    %273 = vmatpush.msra.mxu0 %v253
    %274 = vmatpush.msra.mxu0 %v252
    %275 = vmatpush.msra.mxu0 %v251
    %276 = vmatmul.f32.gmra.mxu0 %v258
    %v277 = vpop.f32.mrf.mxu0
    %v278 = vadd.f32 %v256, %v277
    %279 = vdwg.mxu0
    %v280 = vsub.f32 %v180, %v278
    %v281 = vsub.f32 0.0, %v278
    %v282 = vmul.f32 %v281, 1.442695
    %v283 = vpow.pop %v282
    %285 = vrot.lane.b32.xlu0 %v283, 124
    %v286 = vpop.permute.xlu0 %285
    %v288 = vmul.f32 %v280, %v286
    %v289 = vsub.f32 %v128, %v278
    %v290 = vsel %vm33, %v288, 0.0
    %v291 = vrot.slane %v290, 4
    %v292 = vadd.f32 %v290, %v291
    %v293 = vrot.slane %v292, 2
    %v294 = vadd.f32 %v292, %v293
    %v295 = vrot.slane %v294, 1
    %v296 = vadd.f32 %v294, %v295
    %v297 = vmul.f32 %v296, %v149
    %v298 = vsub.f32 %v288, %v297
    %v299 = vmul.f32 %v298, %v298
    %v300 = vsel %vm33, %v299, 0.0
    %v301 = vrot.slane %v300, 4
    %v302 = vadd.f32 %v300, %v301
    %v303 = vrot.slane %v302, 2
    %v304 = vadd.f32 %v302, %v303
    %v305 = vrot.slane %v304, 1
    %v306 = vadd.f32 %v304, %v305
    %v307 = vmul.f32 %v306, 0.14285715
    %v308 = vadd.f32 %v307, 1e-05
    %v309 = vrsqrt.pop %v308
    %v310 = vmul.f32 %v309, %v308
    %v311 = vmul.f32 %v310, %v309
    %v312 = vmul.f32 0.5, %v311
    %v313 = vsub.f32 1.5, %v312
    %v314 = vmul.f32 %v309, %v313
    %vm315 = vweird.f32 %v308
    %vm316 = vweird.f32 %v309
    %vm317 = vmor %vm315, %vm316
    %v318 = vsel %vm317, %v309, %v314
    %v319 = vld [vmem:[%s192 + $0x3] sm:$0x1]
    %v320 = vld [vmem:[%s192 + $0x4] sm:$0x1]
    %v321 = vmul.f32 %v319, 1.442695
    %v322 = vpow.pop %v321
    %v323 = vmul.f32 %v298, %v318
    %v324 = vperm.slane %v322, 0
    %v325 = vmul.f32 %v324, %v323
    %v326 = vperm.slane %v320, 0
    %v327 = vadd.f32 %v325, %v326
    %v328 = vlog2.pop %v308
    %v329 = vmul.f32 %v328, 0.6931472
    %v330 = vmul.f32 %v329, 0.5
    %v331 = vsub.f32 %v319, %v330
    %v332 = vadd.f32 %v185, %v331
    %333 = vst.msk [vmem:[%s3] sm:$0xff] %vm33, %v327
    %v334 = vperm.slane %v332, 0
    %336 = vrot.lane.b32.xlu0 %v334, 4
    %v337 = vpop.permute.xlu0 %336
    %v339 = vadd.f32 %v289, %v337
    %341 = vrot.lane.b32.xlu0 %v339, 124
    %v342 = vpop.permute.xlu0 %341
    %344 = vst.msk [vmem:[%s4] sm:$0xff] %vm33, %v342
    // Predicated region
    $region18: #{tpu_custom_call.1} parent=1 // pred_check
      _
    $region19: #{tpu_custom_call.1} parent=1 // pred_check_branch
      %346 = sbr.rel (0) target = $region21
    $region20: #{tpu_custom_call.1} parent=1 // pred_region
      _
    $region21: #{tpu_custom_call.1} parent=1 // pred_fallthru
      _
    // Predicated region
    $region22: #{tpu_custom_call.1} parent=1 // pred_check
      _
    $region23: #{tpu_custom_call.1} parent=1 // pred_check_branch
      %348 = sbr.rel (0) target = $region25
    $region24: #{tpu_custom_call.1} parent=1 // pred_region
      _
    $region25: #{tpu_custom_call.1} parent=1 // pred_fallthru
      _
    // Predicated region
    $region26: #{tpu_custom_call.1} parent=1 // pred_check
      _
    $region27: #{tpu_custom_call.1} parent=1 // pred_check_branch
      %350 = sbr.rel (0) target = $region29
    $region28: #{tpu_custom_call.1} parent=1 // pred_region
      _
    $region29: #{tpu_custom_call.1} parent=1 // pred_fallthru
      _
    // Predicated region
    $region30: #{tpu_custom_call.1} parent=1 // pred_check
      _
    $region31: #{tpu_custom_call.1} parent=1 // pred_check_branch
      %352 = sbr.rel (0) target = $region33
    $region32: #{tpu_custom_call.1} parent=1 // pred_region
      _
    $region33: #{tpu_custom_call.1} parent=1 // pred_fallthru
      _
    %353 = vsyncpa [#allocation3], 1

</llo_original>
